<compile_context>
chip_gen: v6e
topology: v6e:2x2x1
jax: 0.10.0
libtpu: 0.0.40
codegen_flags: <defaults>
</compile_context>

<pallas_src>
import functools

import jax
import jax.numpy as jnp
from jax.experimental import pallas as pl
from jax.experimental.pallas import tpu as pltpu


def _mlp_kernel(x_ref, *refs, use_vpu_first, compute_dtype):
    """Fused MLP on one lane-tile of the batch: (tanh(W h + b))* -> W h + b.

    x_ref : [D_in, tile_n]              (batch on the lane axis)
    refs  : (w0, b0, w1, b1, ..., out)  with w_i = [D_out_i, D_in_i],
                                        b_i = [D_out_i, 1], out = [D_out, tile_n]
    """
    out_ref = refs[-1]
    param_refs = refs[:-1]
    n_layers = len(param_refs) // 2

    h = x_ref[...]  # [D_in, tile_n]
    for i in range(n_layers):
        w = param_refs[2 * i][...]
        b = param_refs[2 * i + 1][...].astype(jnp.float32)

        if i == 0 and use_vpu_first:
            # K = D_in is tiny (<=4): do the rank-K update as broadcasted VPU
            # FMAs in otherwise-idle VALU slots instead of an MXU matmul.
            hf = h.astype(jnp.float32)
            wf = w.astype(jnp.float32)
            acc = jnp.broadcast_to(b, (w.shape[0], hf.shape[1]))
            for kk in range(w.shape[1]):
                acc = acc + wf[:, kk:kk + 1] * hf[kk:kk + 1, :]
        else:
            acc = jnp.dot(w.astype(compute_dtype), h.astype(compute_dtype),
                          preferred_element_type=jnp.float32) + b

        if i < n_layers - 1:
            # tanh on the EUP; lane-dense because the batch sits on lanes.
            h = jnp.tanh(acc.astype(compute_dtype))
        else:
            out_ref[...] = acc.astype(out_ref.dtype)


def _round_up(x, m):
    return ((x + m - 1) // m) * m


def _default_compute_dtype():
    """bf16 matmul/tanh (f32 accumulate) on v6e/v7x; f32 on v5e and older."""
    try:
        kind = jax.devices()[0].device_kind.lower()
    except Exception:
        kind = ""
    if "v2" in kind or "v3" in kind or "v4" in kind or "v5" in kind:
        return jnp.float32
    return jnp.bfloat16


def _pick_tile_n(n):
    """Lane-axis tile of the batch: big enough to amortize per-step overhead,
    small enough for v7x's 64 MiB VMEM, and >=2 grid steps when the batch
    allows it so v7x can shard the 'parallel' axis across its 2 TensorCores."""
    for t in (2048, 1024, 512, 256, 128):
        if n >= 2 * t:
            return t
    return 128


def mlp_forward(x, weights, biases, *, tile_n=None, compute_dtype=None):
    """Fused PINN-MLP forward.

    x:       [N, sizes[0]]
    weights: list of [sizes[i], sizes[i+1]]  (transpose of torch's [out, in])
    biases:  list of [1, sizes[i+1]]
    returns: [N, sizes[-1]]
    """
    n, d_in = x.shape
    d_out = weights[-1].shape[1]
    if compute_dtype is None:
        compute_dtype = _default_compute_dtype()
    if tile_n is None:
        tile_n = _pick_tile_n(n)
    n_pad = _round_up(n, tile_n)
    grid = (n_pad // tile_n,)

    use_vpu_first = d_in <= 4  # K=2 first layer -> VPU FMAs, skip the MXU

    # Feature-major plumbing (wrapper-side layout only, no extra compute):
    #   x -> [D_in, N_pad], weights -> [out, in] (MXU-bound ones pre-cast to
    #   compute_dtype), biases -> [out, 1] in f32 (added in the f32 accumulate).
    x_t = jnp.transpose(x)
    if n_pad != n:
        x_t = jnp.pad(x_t, ((0, 0), (0, n_pad - n)))
    weights_t = []
    for li, w in enumerate(weights):
        w_t = jnp.transpose(w)
        if not (li == 0 and use_vpu_first):
            w_t = w_t.astype(compute_dtype)
        weights_t.append(w_t)
    biases_c = [jnp.reshape(b, (b.shape[-1], 1)).astype(jnp.float32)
                for b in biases]

    in_specs = [pl.BlockSpec((d_in, tile_n), lambda i: (0, i))]
    flat_params = []
    for w_t, b_c in zip(weights_t, biases_c):
        in_specs.append(pl.BlockSpec(w_t.shape, lambda i: (0, 0)))
        in_specs.append(pl.BlockSpec(b_c.shape, lambda i: (0, 0)))
        flat_params.extend([w_t, b_c])

    out_specs = pl.BlockSpec((d_out, tile_n), lambda i: (0, i))

    # Advisory cost estimate + explicit VMEM budget (fits v7x's 64 MiB).
    layer_dims = [w.shape for w in weights]  # [(in, out), ...]
    flops = 2 * n_pad * sum(di * do for di, do in layer_dims)
    transcendentals = n_pad * sum(do for _, do in layer_dims[:-1])
    param_bytes = (sum(w.size * w.dtype.itemsize for w in weights_t)
                   + sum(b.size * b.dtype.itemsize for b in biases_c))
    bytes_accessed = (x.size + n_pad * d_out) * x.dtype.itemsize + param_bytes

    max_width = max([d_in, d_out] + [do for _, do in layer_dims])
    vmem_budget = (
        2 * d_in * tile_n * 4          # double-buffered input block
        + 2 * d_out * tile_n * 4       # double-buffered output block
        + 2 * param_bytes              # (possibly double-buffered) params
        + 4 * max_width * tile_n * 4   # live activations + temporaries
        + (1 << 20)                    # headroom
    )
    vmem_limit = int(min(64 * 1024 * 1024, max(vmem_budget, 16 * 1024 * 1024)))

    kernel = functools.partial(
        _mlp_kernel, use_vpu_first=use_vpu_first, compute_dtype=compute_dtype)

    y_t = pl.pallas_call(
        kernel,
        out_shape=jax.ShapeDtypeStruct((d_out, n_pad), x.dtype),
        grid_spec=pltpu.PrefetchScalarGridSpec(
            num_scalar_prefetch=0,
            grid=grid,
            in_specs=in_specs,
            out_specs=out_specs,
        ),
        compiler_params=pltpu.CompilerParams(
            dimension_semantics=("parallel",),
            vmem_limit_bytes=vmem_limit,
        ),
        cost_estimate=pl.CostEstimate(
            flops=int(flops),
            transcendentals=int(transcendentals),
            bytes_accessed=int(bytes_accessed),
        ),
    )(x_t, *flat_params)

    return jnp.transpose(y_t[:, :n])  # back to [N, D_out]


def init_mlp_params(key, sizes, k):
    """Deterministic init mirroring torch.nn.Linear (U[-1/sqrt(fan_in), +])."""
    weights, biases = [], []
    for i in range(len(sizes) - 1):
        fan_in, fan_out = sizes[i], sizes[i + 1]
        key, kw, kb = jax.random.split(key, 3)
        bound = 1.0 / jnp.sqrt(jnp.float32(fan_in))
        # stored as [in, out] = transpose of torch's [out, in]
        w = jax.random.uniform(kw, (fan_in, fan_out), jnp.float32, -bound, bound)
        b = jax.random.uniform(kb, (1, fan_out), jnp.float32, -bound, bound)
        weights.append(w)
        biases.append(b)
    # self.ka = nn.Parameter([k]) — present in the module but unused in forward.
    ka = jnp.array([k], dtype=jnp.float32)
    return weights, biases, ka


def mlp_reference(x, weights, biases):
    h = x
    for w, b in zip(weights[:-1], biases[:-1]):
        h = jnp.tanh(h @ w + b)
    return h @ weights[-1] + biases[-1]


if __name__ == "__main__":
    key = jax.random.PRNGKey(0)

    # PINN-style MLP: 2 -> 32 -> 32 -> 1
    sizes = [2, 32, 32, 1]
    k = 1.0
    batch = 1000  # not a multiple of the lane tile -> exercises padding path

    kx, kp = jax.random.split(key)
    x = jax.random.normal(kx, (batch, sizes[0]), dtype=jnp.float32)
    weights, biases, ka = init_mlp_params(kp, sizes, k)

    y_ref = mlp_reference(x, weights, biases)

    # 1) strict f32 compute path (matches the PyTorch module numerics)
    y_f32 = jax.block_until_ready(
        mlp_forward(x, weights, biases, compute_dtype=jnp.float32))
    assert y_f32.shape == (batch, sizes[-1])
    assert jnp.allclose(y_f32, y_ref, atol=1e-5, rtol=1e-5)

    # 2) default path: bf16 matmul/tanh on v6e/v7x (f32 accumulate), f32 on v5e
    cd = _default_compute_dtype()
    y = jax.block_until_ready(mlp_forward(x, weights, biases))
    tol = 1e-5 if cd == jnp.float32 else 5e-2
    assert y.shape == (batch, sizes[-1])
    assert jnp.allclose(y, y_ref, atol=tol, rtol=tol)

    print("KERNEL_OK")
</pallas_src>

<mosaic_0001>
module attributes {stable_mosaic.version = 11 : i64} {
  func.func @_mlp_kernel(%arg0: i32, %arg1: memref<2x256xf32, #tpu.memory_space<vmem>>, %arg2: memref<32x2xf32, #tpu.memory_space<vmem>>, %arg3: memref<32x1xf32, #tpu.memory_space<vmem>>, %arg4: memref<32x32xf32, #tpu.memory_space<vmem>>, %arg5: memref<32x1xf32, #tpu.memory_space<vmem>>, %arg6: memref<1x32xf32, #tpu.memory_space<vmem>>, %arg7: memref<1x1xf32, #tpu.memory_space<vmem>>, %arg8: memref<1x256xf32, #tpu.memory_space<vmem>>) attributes {dimension_semantics = [#tpu.dimension_semantics<parallel>], iteration_bounds = array<i64: 4>, scalar_prefetch = 0 : i64, scratch_operands = 0 : i64, tpu.core_type = #tpu.core_type<tc>, window_params = [{transform_indices = @transform_0, window_bounds = array<i64: 2, 256>}, {pipeline_mode = #tpu.pipeline_mode<synchronous>, transform_indices = @transform_1, window_bounds = array<i64: 32, 2>}, {pipeline_mode = #tpu.pipeline_mode<synchronous>, transform_indices = @transform_2, window_bounds = array<i64: 32, 1>}, {pipeline_mode = #tpu.pipeline_mode<synchronous>, transform_indices = @transform_3, window_bounds = array<i64: 32, 32>}, {pipeline_mode = #tpu.pipeline_mode<synchronous>, transform_indices = @transform_4, window_bounds = array<i64: 32, 1>}, {pipeline_mode = #tpu.pipeline_mode<synchronous>, transform_indices = @transform_5, window_bounds = array<i64: 1, 32>}, {pipeline_mode = #tpu.pipeline_mode<synchronous>, transform_indices = @transform_6, window_bounds = array<i64: 1, 1>}, {transform_indices = @transform_7, window_bounds = array<i64: 1, 256>}]} {
    %c0 = arith.constant 0 : index
    %c0_0 = arith.constant 0 : index
    %0 = vector.load %arg1[%c0, %c0_0] : memref<2x256xf32, #tpu.memory_space<vmem>>, vector<2x256xf32>
    %c0_1 = arith.constant 0 : index
    %c0_2 = arith.constant 0 : index
    %1 = vector.load %arg2[%c0_1, %c0_2] : memref<32x2xf32, #tpu.memory_space<vmem>>, vector<32x2xf32>
    %c0_3 = arith.constant 0 : index
    %c0_4 = arith.constant 0 : index
    %2 = vector.load %arg3[%c0_3, %c0_4] : memref<32x1xf32, #tpu.memory_space<vmem>>, vector<32x1xf32>
    %3 = vector.shape_cast %2 : vector<32x1xf32> to vector<32x1xf32>
    %4 = vector.broadcast %3 : vector<32x1xf32> to vector<32x256xf32>
    %5 = vector.extract_strided_slice %1 {offsets = [0, 0], sizes = [32, 1], strides = [1, 1]} : vector<32x2xf32> to vector<32x1xf32>
    %6 = vector.extract_strided_slice %0 {offsets = [0, 0], sizes = [1, 256], strides = [1, 1]} : vector<2x256xf32> to vector<1x256xf32>
    %7 = vector.broadcast %5 : vector<32x1xf32> to vector<32x256xf32>
    %8 = vector.broadcast %6 : vector<1x256xf32> to vector<32x256xf32>
    %9 = arith.mulf %7, %8 : vector<32x256xf32>
    %10 = arith.addf %4, %9 : vector<32x256xf32>
    %11 = vector.extract_strided_slice %1 {offsets = [0, 1], sizes = [32, 1], strides = [1, 1]} : vector<32x2xf32> to vector<32x1xf32>
    %12 = vector.extract_strided_slice %0 {offsets = [1, 0], sizes = [1, 256], strides = [1, 1]} : vector<2x256xf32> to vector<1x256xf32>
    %13 = vector.broadcast %11 : vector<32x1xf32> to vector<32x256xf32>
    %14 = vector.broadcast %12 : vector<1x256xf32> to vector<32x256xf32>
    %15 = arith.mulf %13, %14 : vector<32x256xf32>
    %16 = arith.addf %10, %15 : vector<32x256xf32>
    %17 = math.tanh %16 : vector<32x256xf32>
    %c0_5 = arith.constant 0 : index
    %c0_6 = arith.constant 0 : index
    %18 = vector.load %arg4[%c0_5, %c0_6] : memref<32x32xf32, #tpu.memory_space<vmem>>, vector<32x32xf32>
    %c0_7 = arith.constant 0 : index
    %c0_8 = arith.constant 0 : index
    %19 = vector.load %arg5[%c0_7, %c0_8] : memref<32x1xf32, #tpu.memory_space<vmem>>, vector<32x1xf32>
    %cst = arith.constant dense<0.000000e+00> : vector<32x256xf32>
    %20 = tpu.matmul %18, %17, %cst {dimension_numbers = #tpu.dot_dimension_numbers<[1], [0], [0], [1], [0, 0, 1, 1], [], []>} : vector<32x32xf32>, vector<32x256xf32>, vector<32x256xf32> -> vector<32x256xf32>
    %21 = vector.broadcast %19 : vector<32x1xf32> to vector<32x256xf32>
    %22 = arith.addf %20, %21 : vector<32x256xf32>
    %23 = math.tanh %22 : vector<32x256xf32>
    %c0_9 = arith.constant 0 : index
    %c0_10 = arith.constant 0 : index
    %24 = vector.load %arg6[%c0_9, %c0_10] : memref<1x32xf32, #tpu.memory_space<vmem>>, vector<1x32xf32>
    %c0_11 = arith.constant 0 : index
    %c0_12 = arith.constant 0 : index
    %25 = vector.load %arg7[%c0_11, %c0_12] : memref<1x1xf32, #tpu.memory_space<vmem>>, vector<1x1xf32>
    %cst_13 = arith.constant dense<0.000000e+00> : vector<1x256xf32>
    %26 = tpu.matmul %24, %23, %cst_13 {dimension_numbers = #tpu.dot_dimension_numbers<[1], [0], [0], [1], [0, 0, 1, 1], [], []>} : vector<1x32xf32>, vector<32x256xf32>, vector<1x256xf32> -> vector<1x256xf32>
    %27 = vector.broadcast %25 : vector<1x1xf32> to vector<1x256xf32>
    %28 = arith.addf %26, %27 : vector<1x256xf32>
    %c0_14 = arith.constant 0 : index
    %c0_15 = arith.constant 0 : index
    %29 = vector.load %arg8[%c0_14, %c0_15] : memref<1x256xf32, #tpu.memory_space<vmem>>, vector<1x256xf32>
    tpu.vector_store %arg8[%c0_14, %c0_15], %28 {strides = array<i32>} : memref<1x256xf32, #tpu.memory_space<vmem>>, vector<1x256xf32>,
    return
  }
  func.func @transform_0(%arg0: i32) -> (i32, i32) {
    %c0_i32 = arith.constant 0 : i32
    %c0_i32_0 = arith.constant 0 : i32
    return %c0_i32, %arg0 : i32, i32
  }
  func.func @transform_1(%arg0: i32) -> (i32, i32) {
    %c0_i32 = arith.constant 0 : i32
    %c0_i32_0 = arith.constant 0 : i32
    %c0_i32_1 = arith.constant 0 : i32
    return %c0_i32, %c0_i32_0 : i32, i32
  }
  func.func @transform_2(%arg0: i32) -> (i32, i32) {
    %c0_i32 = arith.constant 0 : i32
    %c0_i32_0 = arith.constant 0 : i32
    %c0_i32_1 = arith.constant 0 : i32
    return %c0_i32, %c0_i32_0 : i32, i32
  }
  func.func @transform_3(%arg0: i32) -> (i32, i32) {
    %c0_i32 = arith.constant 0 : i32
    %c0_i32_0 = arith.constant 0 : i32
    %c0_i32_1 = arith.constant 0 : i32
    return %c0_i32, %c0_i32_0 : i32, i32
  }
  func.func @transform_4(%arg0: i32) -> (i32, i32) {
    %c0_i32 = arith.constant 0 : i32
    %c0_i32_0 = arith.constant 0 : i32
    %c0_i32_1 = arith.constant 0 : i32
    return %c0_i32, %c0_i32_0 : i32, i32
  }
  func.func @transform_5(%arg0: i32) -> (i32, i32) {
    %c0_i32 = arith.constant 0 : i32
    %c0_i32_0 = arith.constant 0 : i32
    %c0_i32_1 = arith.constant 0 : i32
    return %c0_i32, %c0_i32_0 : i32, i32
  }
  func.func @transform_6(%arg0: i32) -> (i32, i32) {
    %c0_i32 = arith.constant 0 : i32
    %c0_i32_0 = arith.constant 0 : i32
    %c0_i32_1 = arith.constant 0 : i32
    return %c0_i32, %c0_i32_0 : i32, i32
  }
  func.func @transform_7(%arg0: i32) -> (i32, i32) {
    %c0_i32 = arith.constant 0 : i32
    %c0_i32_0 = arith.constant 0 : i32
    return %c0_i32, %arg0 : i32, i32
  }
}

</mosaic_0001>

<llo_original>
// kernel: tpu_custom_call.1
$region0: #{tpu_custom_call.1}
  #allocation0 [shape = 'u32[]', space=smem, size = 0x4, offset = 0x4, fixed_abs, tag = 'smem constant byte address 0x4 - core index']
  #allocation1 [shape = 'u32[144,128]{1,0:T(1,128)}', space=vmem, size = 0x12000, scoped, tag = 'internal scratch']
  #allocation2 [shape = 'f32[1,1]{1,0:T(1,128)S(1)}', space=vmem, size = 0x200, scoped, tag = 'scoped memory for tpu_custom_call.1']
  %s0 = inlined_call_operand.vmem [shape: f32[2,1024], index: 0, kind: input, shape index: {}]
  %s1 = inlined_call_operand.vmem [shape: f32[32,2], index: 1, kind: input, shape index: {}]
  %s2 = inlined_call_operand.vmem [shape: f32[32,1], index: 2, kind: input, shape index: {}]
  %s3 = inlined_call_operand.vmem [shape: f32[32,32], index: 3, kind: input, shape index: {}]
  %s4 = inlined_call_operand.vmem [shape: f32[32,1], index: 4, kind: input, shape index: {}]
  %s5 = inlined_call_operand.vmem [shape: f32[1,32], index: 5, kind: input, shape index: {}]
  %s6 = inlined_call_operand.<no memory space> [shape: f32[1,1], index: 6, kind: input, shape index: {}]
  %s7 = inlined_call_operand.hbm [shape: f32[1,1024], index: 7, kind: output, shape index: {}]
  %s8 = sld [smem:[#allocation0]]
  $region61: #{tpu_custom_call.1} parent=0
    _
  %s10 = ssub.s32 1, %s8
  %s11 = scalar_select 0, %s10, %s8
  %v12 = vstv %s6
  %13 = vst [vmem:[#allocation2] sm:$0x1] %v12
  $region1: #{tpu_custom_call.1} parent=0
    #allocation3 [shape = 'u8[2048]{0}', space=vmem, size = 0x800, scoped, tag = 'output window, operand 0']
    #allocation4 [shape = 's32[2]{0}', space=sflag, size = 0x8, scoped, tag = 'scoped memory for tpu_custom_call.1']
    %14 = vsyncpa [#allocation4], 0
    %s15 = scalar_lea.sflag [#allocation4], 1
    %16 = vsyncpa %s15, 0
    loop: start=0, step=1, limit=6
    $region2: #{tpu_custom_call.1} parent=1 // loop_pre_header
      _
    $region3: #{tpu_custom_call.1} parent=1 // loop_header
      %s18 = sphi 0, %s22
      %p19 = scmp.ge.s32.totalorder %s18, 6
      %s28 = sphi 0, %s30
      %s31 = sphi 0, %s28
      %s32 = sphi 0, %s31
      %s48 = sphi 0, %s32
      %s52 = sphi 0, %s52
      %s54 = sphi 0, %s52
      %s55 = sphi 0, %s54
      %s69 = sphi 0, %s55
      %s73 = sphi 0, %s73
      %s75 = sphi 0, %s73
      %s76 = sphi 0, %s75
      %s90 = sphi 0, %s76
      %s94 = sphi 0, %s94
      %s96 = sphi 0, %s94
      %s97 = sphi 0, %s96
      %s111 = sphi 0, %s97
      %s115 = sphi 0, %s115
      %s117 = sphi 0, %s115
      %s118 = sphi 0, %s117
      %s132 = sphi 0, %s118
      %s136 = sphi 0, %s136
      %s138 = sphi 0, %s136
      %s139 = sphi 0, %s138
      %s153 = sphi 0, %s139
      %s157 = sphi 0, %s157
      %s159 = sphi 0, %s157
      %s160 = sphi 0, %s159
      %s174 = sphi 0, %s160
      %s180 = sphi 0, %s182
      %s183 = sphi 0, %s180
      %s184 = sphi 0, %s183
      %s200 = sphi 0, %s184
    $region4: #{tpu_custom_call.1} parent=1 // loop_header_branch
      %21 = sbr.rel (%p19) target = $region8
    $region5: #{tpu_custom_call.1} parent=1 // loop_body
      %s23 = ssub.s32 %s18, 1
      %s24 = ssub.s32 %s18, 2
      %s25 = sadd.s32 %s18, 1
      %s26 = ssub.s32 %s18, %s25
      %p27 = scmp.eq.s32.totalorder %s26, 0
      %s29 = sadd.s32 %s28, 1
      %s30 = scalar_select %p27, %s28, %s29
      %p33 = pneg %p27
      %p34 = scmp.eq.s32.totalorder %s18, 3
      %p35 = por %p33, %p34
      %p36 = scmp.ne.s32.totalorder %s28, %s31
      %p37 = scmp.eq.s32.totalorder %s18, 0
      %p38 = por %p36, %p37
      %p39 = scmp.ne.s32.totalorder %s28, %s31
      %p40 = scmp.eq.s32.totalorder %s23, 3
      %p41 = por %p39, %p40
      %p42 = scmp.ne.s32.totalorder %s31, %s32
      %p43 = scmp.eq.s32.totalorder %s23, 0
      %p44 = por %p42, %p43
      %p45 = scmp.ne.s32.totalorder %s31, %s32
      %p46 = scmp.eq.s32.totalorder %s24, 3
      %p47 = por %p45, %p46
      %p49 = scmp.ne.s32.totalorder %s32, %s48
      %p50 = scmp.eq.s32.totalorder %s24, 0
      %p51 = por %p49, %p50
      %s53 = sadd.s32 %s52, 1
      %p56 = scmp.eq.s32.totalorder %s18, 3
      %p57 = scmp.ne.s32.totalorder %s52, %s54
      %p58 = scmp.eq.s32.totalorder %s18, 0
      %p59 = por %p57, %p58
      %p60 = scmp.ne.s32.totalorder %s52, %s54
      %p61 = scmp.eq.s32.totalorder %s23, 3
      %p62 = por %p60, %p61
      %p63 = scmp.ne.s32.totalorder %s54, %s55
      %p64 = scmp.eq.s32.totalorder %s23, 0
      %p65 = por %p63, %p64
      %p66 = scmp.ne.s32.totalorder %s54, %s55
      %p67 = scmp.eq.s32.totalorder %s24, 3
      %p68 = por %p66, %p67
      %p70 = scmp.ne.s32.totalorder %s55, %s69
      %p71 = scmp.eq.s32.totalorder %s24, 0
      %p72 = por %p70, %p71
      %s74 = sadd.s32 %s73, 1
      %p77 = scmp.eq.s32.totalorder %s18, 3
      %p78 = scmp.ne.s32.totalorder %s73, %s75
      %p79 = scmp.eq.s32.totalorder %s18, 0
      %p80 = por %p78, %p79
      %p81 = scmp.ne.s32.totalorder %s73, %s75
      %p82 = scmp.eq.s32.totalorder %s23, 3
      %p83 = por %p81, %p82
      %p84 = scmp.ne.s32.totalorder %s75, %s76
      %p85 = scmp.eq.s32.totalorder %s23, 0
      %p86 = por %p84, %p85
      %p87 = scmp.ne.s32.totalorder %s75, %s76
      %p88 = scmp.eq.s32.totalorder %s24, 3
      %p89 = por %p87, %p88
      %p91 = scmp.ne.s32.totalorder %s76, %s90
      %p92 = scmp.eq.s32.totalorder %s24, 0
      %p93 = por %p91, %p92
      %s95 = sadd.s32 %s94, 1
      %p98 = scmp.eq.s32.totalorder %s18, 3
      %p99 = scmp.ne.s32.totalorder %s94, %s96
      %p100 = scmp.eq.s32.totalorder %s18, 0
      %p101 = por %p99, %p100
      %p102 = scmp.ne.s32.totalorder %s94, %s96
      %p103 = scmp.eq.s32.totalorder %s23, 3
      %p104 = por %p102, %p103
      %p105 = scmp.ne.s32.totalorder %s96, %s97
      %p106 = scmp.eq.s32.totalorder %s23, 0
      %p107 = por %p105, %p106
      %p108 = scmp.ne.s32.totalorder %s96, %s97
      %p109 = scmp.eq.s32.totalorder %s24, 3
      %p110 = por %p108, %p109
      %p112 = scmp.ne.s32.totalorder %s97, %s111
      %p113 = scmp.eq.s32.totalorder %s24, 0
      %p114 = por %p112, %p113
      %s116 = sadd.s32 %s115, 1
      %p119 = scmp.eq.s32.totalorder %s18, 3
      %p120 = scmp.ne.s32.totalorder %s115, %s117
      %p121 = scmp.eq.s32.totalorder %s18, 0
      %p122 = por %p120, %p121
      %p123 = scmp.ne.s32.totalorder %s115, %s117
      %p124 = scmp.eq.s32.totalorder %s23, 3
      %p125 = por %p123, %p124
      %p126 = scmp.ne.s32.totalorder %s117, %s118
      %p127 = scmp.eq.s32.totalorder %s23, 0
      %p128 = por %p126, %p127
      %p129 = scmp.ne.s32.totalorder %s117, %s118
      %p130 = scmp.eq.s32.totalorder %s24, 3
      %p131 = por %p129, %p130
      %p133 = scmp.ne.s32.totalorder %s118, %s132
      %p134 = scmp.eq.s32.totalorder %s24, 0
      %p135 = por %p133, %p134
      %s137 = sadd.s32 %s136, 1
      %p140 = scmp.eq.s32.totalorder %s18, 3
      %p141 = scmp.ne.s32.totalorder %s136, %s138
      %p142 = scmp.eq.s32.totalorder %s18, 0
      %p143 = por %p141, %p142
      %p144 = scmp.ne.s32.totalorder %s136, %s138
      %p145 = scmp.eq.s32.totalorder %s23, 3
      %p146 = por %p144, %p145
      %p147 = scmp.ne.s32.totalorder %s138, %s139
      %p148 = scmp.eq.s32.totalorder %s23, 0
      %p149 = por %p147, %p148
      %p150 = scmp.ne.s32.totalorder %s138, %s139
      %p151 = scmp.eq.s32.totalorder %s24, 3
      %p152 = por %p150, %p151
      %p154 = scmp.ne.s32.totalorder %s139, %s153
      %p155 = scmp.eq.s32.totalorder %s24, 0
      %p156 = por %p154, %p155
      %s158 = sadd.s32 %s157, 1
      %p161 = scmp.eq.s32.totalorder %s18, 3
      %p162 = scmp.ne.s32.totalorder %s157, %s159
      %p163 = scmp.eq.s32.totalorder %s18, 0
      %p164 = por %p162, %p163
      %p165 = scmp.ne.s32.totalorder %s157, %s159
      %p166 = scmp.eq.s32.totalorder %s23, 3
      %p167 = por %p165, %p166
      %p168 = scmp.ne.s32.totalorder %s159, %s160
      %p169 = scmp.eq.s32.totalorder %s23, 0
      %p170 = por %p168, %p169
      %p171 = scmp.ne.s32.totalorder %s159, %s160
      %p172 = scmp.eq.s32.totalorder %s24, 3
      %p173 = por %p171, %p172
      %p175 = scmp.ne.s32.totalorder %s160, %s174
      %p176 = scmp.eq.s32.totalorder %s24, 0
      %p177 = por %p175, %p176
      %s178 = ssub.s32 %s18, %s25
      %p179 = scmp.eq.s32.totalorder %s178, 0
      %s181 = sadd.s32 %s180, 1
      %s182 = scalar_select %p179, %s180, %s181
      %p185 = pneg %p179
      %p186 = scmp.eq.s32.totalorder %s18, 3
      %p187 = por %p185, %p186
      %p188 = scmp.ne.s32.totalorder %s180, %s183
      %p189 = scmp.eq.s32.totalorder %s18, 0
      %p190 = por %p188, %p189
      %p191 = scmp.ne.s32.totalorder %s180, %s183
      %p192 = scmp.eq.s32.totalorder %s23, 3
      %p193 = por %p191, %p192
      %p194 = scmp.ne.s32.totalorder %s183, %s184
      %p195 = scmp.eq.s32.totalorder %s23, 0
      %p196 = por %p194, %p195
      %p197 = scmp.ne.s32.totalorder %s183, %s184
      %p198 = scmp.eq.s32.totalorder %s24, 3
      %p199 = por %p197, %p198
      %p201 = scmp.ne.s32.totalorder %s184, %s200
      %p202 = scmp.eq.s32.totalorder %s24, 0
      %p203 = por %p201, %p202
      %p204 = scmp.le.s32.totalorder 1, %s18
      %p205 = scmp.lt.s32.totalorder %s18, 5
      %p206 = pnand %p204, %p205
      %p207 = pneg %p206
      // Predicated region
      $region9: #{tpu_custom_call.1} parent=5 // pred_check
        _
      $region10: #{tpu_custom_call.1} parent=5 // pred_check_branch
        %209 = sbr.rel (%p206) target = $region12
      $region11: #{tpu_custom_call.1} parent=5 // pred_region
        %s210 = ssub.s32 %s18, 1
        // Predicated region
        $region13: #{tpu_custom_call.1} parent=11 // pred_check
          %p211 = pneg %p65
        $region14: #{tpu_custom_call.1} parent=11 // pred_check_branch
          %213 = sbr.rel (%p211) target = $region16
        $region15: #{tpu_custom_call.1} parent=11 // pred_region
          _
        $region16: #{tpu_custom_call.1} parent=11 // pred_fallthru
          _
        // Predicated region
        $region17: #{tpu_custom_call.1} parent=11 // pred_check
          %p214 = pneg %p86
        $region18: #{tpu_custom_call.1} parent=11 // pred_check_branch
          %216 = sbr.rel (%p214) target = $region20
        $region19: #{tpu_custom_call.1} parent=11 // pred_region
          _
        $region20: #{tpu_custom_call.1} parent=11 // pred_fallthru
          _
        // Predicated region
        $region21: #{tpu_custom_call.1} parent=11 // pred_check
          %p217 = pneg %p107
        $region22: #{tpu_custom_call.1} parent=11 // pred_check_branch
          %219 = sbr.rel (%p217) target = $region24
        $region23: #{tpu_custom_call.1} parent=11 // pred_region
          _
        $region24: #{tpu_custom_call.1} parent=11 // pred_fallthru
          _
        // Predicated region
        $region25: #{tpu_custom_call.1} parent=11 // pred_check
          %p220 = pneg %p128
        $region26: #{tpu_custom_call.1} parent=11 // pred_check_branch
          %222 = sbr.rel (%p220) target = $region28
        $region27: #{tpu_custom_call.1} parent=11 // pred_region
          _
        $region28: #{tpu_custom_call.1} parent=11 // pred_fallthru
          _
        // Predicated region
        $region29: #{tpu_custom_call.1} parent=11 // pred_check
          %p223 = pneg %p149
        $region30: #{tpu_custom_call.1} parent=11 // pred_check_branch
          %225 = sbr.rel (%p223) target = $region32
        $region31: #{tpu_custom_call.1} parent=11 // pred_region
          _
        $region32: #{tpu_custom_call.1} parent=11 // pred_fallthru
          _
        // Predicated region
        $region33: #{tpu_custom_call.1} parent=11 // pred_check
          %p226 = pneg %p170
        $region34: #{tpu_custom_call.1} parent=11 // pred_check_branch
          %228 = sbr.rel (%p226) target = $region36
        $region35: #{tpu_custom_call.1} parent=11 // pred_region
          _
        $region36: #{tpu_custom_call.1} parent=11 // pred_fallthru
          _
      $region12: #{tpu_custom_call.1} parent=5 // pred_fallthru
        _
      %p229 = scmp.lt.s32.totalorder %s18, 4
      // Predicated region
      $region37: #{tpu_custom_call.1} parent=5 // pred_check
        %p230 = pneg %p229
      $region38: #{tpu_custom_call.1} parent=5 // pred_check_branch
        %232 = sbr.rel (%p230) target = $region40
      $region39: #{tpu_custom_call.1} parent=5 // pred_region
        // Predicated region
        $region41: #{tpu_custom_call.1} parent=39 // pred_check
          %p233 = pneg %p38
        $region42: #{tpu_custom_call.1} parent=39 // pred_check_branch
          %235 = sbr.rel (%p233) target = $region44
        $region43: #{tpu_custom_call.1} parent=39 // pred_region
          %s236 = smul.u32 2, %s18
          %p237 = scmp.lt.s32.totalorder %s236, 7
          %s238 = scalar_select %p237, %s236, 7
          %s239 = smul.addr %s238, 2
          %s240 = scalar_lea.vmem %s0, %s239
          %s241 = smul.u32 2, %s18
        $region44: #{tpu_custom_call.1} parent=39 // pred_fallthru
          _
      $region40: #{tpu_custom_call.1} parent=5 // pred_fallthru
        _
      %p242 = scmp.le.s32.totalorder 1, %s18
      %p243 = scmp.lt.s32.totalorder %s18, 5
      %p244 = pnand %p242, %p243
      %p245 = pneg %p244
      // Predicated region
      $region45: #{tpu_custom_call.1} parent=5 // pred_check
        _
      $region46: #{tpu_custom_call.1} parent=5 // pred_check_branch
        %247 = sbr.rel (%p244) target = $region48
      $region47: #{tpu_custom_call.1} parent=5 // pred_region
        %s248 = ssub.s32 %s18, 1
        %s249 = smul.u32 2, %s23
        %p250 = scmp.lt.s32.totalorder %s249, 7
        %s251 = scalar_select %p250, %s249, 7
        %s252 = smul.addr %s251, 2
        %s253 = scalar_lea.vmem %s0, %s252
        %p254 = pneg %p44
        %p255 = pneg %p41
        %p256 = pneg %p65
        %p257 = pneg %p62
        %p258 = pneg %p86
        %p259 = pneg %p83
        %p260 = pneg %p107
        %p261 = pneg %p104
        %p262 = pneg %p128
        %p263 = pneg %p125
        %p264 = pneg %p149
        %p265 = pneg %p146
        %p266 = pneg %p170
        %p267 = pneg %p167
        %p268 = pneg %p196
        %p269 = pneg %p193
        %s270 = sand.u32 %s183, 1
        %s271 = scalar_lea.sflag [#allocation4], %s270
        %s272 = sand.u32 %s183, 1
        %s273 = smul.addr %s272, 2
        %s274 = scalar_lea.vmem [#allocation3], %s273
        %s275 = smul.u32 2, %s23
        %p276 = scmp.lt.s32.totalorder %s275, 7
        %s277 = scalar_select %p276, %s275, 7
        %s278 = smul.addr %s277, 2
        %s279 = scalar_lea.vmem %s0, %s278
        %s280 = smul.u32 2, %s23
        %s281 = smul.u32 2, %s23
        %v282 = vld [vmem:[%s279] sm:$0xf]
        %v283 = vld [vmem:[%s1] sm:$0xff]
        %v284 = vld [vmem:[%s1 + $0x8] sm:$0xff]
        %v285 = vld [vmem:[%s1 + $0x10] sm:$0xff]
        %v286 = vld [vmem:[%s1 + $0x18] sm:$0xff]
        %v287 = vld [vmem:[%s2] sm:$0xff]
        %v288 = vld [vmem:[%s2 + $0x8] sm:$0xff]
        %v289 = vld [vmem:[%s2 + $0x10] sm:$0xff]
        %v290 = vld [vmem:[%s2 + $0x18] sm:$0xff]
        %292 = vset.pattern.permute.xlu0 0
        %293 = vperm.xlu0 %292, %v287
        %v294 = vpop.permute.xlu0 %293
        %297 = vset.pattern.permute.xlu0 0
        %298 = vperm.xlu0 %297, %v288
        %v299 = vpop.permute.xlu0 %298
        %302 = vset.pattern.permute.xlu0 0
        %303 = vperm.xlu0 %302, %v289
        %v304 = vpop.permute.xlu0 %303
        %307 = vset.pattern.permute.xlu0 0
        %308 = vperm.xlu0 %307, %v290
        %v309 = vpop.permute.xlu0 %308
        %312 = vset.pattern.permute.xlu0 0
        %313 = vperm.xlu0 %312, %v283
        %v314 = vpop.permute.xlu0 %313
        %317 = vset.pattern.permute.xlu0 0
        %318 = vperm.xlu0 %317, %v284
        %v319 = vpop.permute.xlu0 %318
        %322 = vset.pattern.permute.xlu0 0
        %323 = vperm.xlu0 %322, %v285
        %v324 = vpop.permute.xlu0 %323
        %327 = vset.pattern.permute.xlu0 0
        %328 = vperm.xlu0 %327, %v286
        %v329 = vpop.permute.xlu0 %328
        %v332 = vlaneseq
        %v333 = vshrl.u32 %v332, 7
        %v334 = vsub.s32 0, %v333
        %v335 = vrot.slane %v282, %v334
        %v336 = vlaneseq
        %v337 = vshrl.u32 %v336, 7
        %v338 = vsub.s32 2, %v337
        %v339 = vrot.slane %v282, %v338
        %v342 = vlaneseq
        %v343 = vshrl.u32 %v342, 7
        %v344 = vsub.s32 0, %v343
        %v345 = vrot.slane %v335, %v344
        %v346 = vlaneseq
        %v347 = vshrl.u32 %v346, 7
        %v348 = vsub.s32 0, %v347
        %v349 = vrot.slane %v339, %v348
        %v350 = vmul.f32 %v314, %v345
        %v351 = vmul.f32 %v314, %v349
        %v352 = vmul.f32 %v319, %v345
        %v353 = vmul.f32 %v319, %v349
        %v354 = vmul.f32 %v324, %v345
        %v355 = vmul.f32 %v324, %v349
        %v356 = vmul.f32 %v329, %v345
        %v357 = vmul.f32 %v329, %v349
        %v358 = vadd.f32 %v294, %v350
        %v359 = vadd.f32 %v294, %v351
        %v360 = vadd.f32 %v299, %v352
        %v361 = vadd.f32 %v299, %v353
        %v362 = vadd.f32 %v304, %v354
        %v363 = vadd.f32 %v304, %v355
        %v364 = vadd.f32 %v309, %v356
        %v365 = vadd.f32 %v309, %v357
        %366 = vset.pattern.permute.xlu0 1
        %367 = vperm.xlu0 %366, %v283
        %v368 = vpop.permute.xlu0 %367
        %370 = vset.pattern.permute.xlu0 1
        %371 = vperm.xlu0 %370, %v284
        %v372 = vpop.permute.xlu0 %371
        %374 = vset.pattern.permute.xlu0 1
        %375 = vperm.xlu0 %374, %v285
        %v376 = vpop.permute.xlu0 %375
        %378 = vset.pattern.permute.xlu0 1
        %379 = vperm.xlu0 %378, %v286
        %v380 = vpop.permute.xlu0 %379
        %v382 = vlaneseq
        %v383 = vshrl.u32 %v382, 7
        %v384 = vsub.s32 1, %v383
        %v385 = vrot.slane %v282, %v384
        %v386 = vlaneseq
        %v387 = vshrl.u32 %v386, 7
        %v388 = vsub.s32 3, %v387
        %v389 = vrot.slane %v282, %v388
        %v392 = vlaneseq
        %v393 = vshrl.u32 %v392, 7
        %v394 = vsub.s32 1, %v393
        %v395 = vrot.slane %v385, %v394
        %v396 = vlaneseq
        %v397 = vshrl.u32 %v396, 7
        %v398 = vsub.s32 1, %v397
        %v399 = vrot.slane %v389, %v398
        %v400 = vmul.f32 %v368, %v395
        %v401 = vmul.f32 %v368, %v399
        %v402 = vmul.f32 %v372, %v395
        %v403 = vmul.f32 %v372, %v399
        %v404 = vmul.f32 %v376, %v395
        %v405 = vmul.f32 %v376, %v399
        %v406 = vmul.f32 %v380, %v395
        %v407 = vmul.f32 %v380, %v399
        %v408 = vadd.f32 %v358, %v400
        %v409 = vadd.f32 %v359, %v401
        %v410 = vadd.f32 %v360, %v402
        %v411 = vadd.f32 %v361, %v403
        %v412 = vadd.f32 %v362, %v404
        %v413 = vadd.f32 %v363, %v405
        %v414 = vadd.f32 %v364, %v406
        %v415 = vadd.f32 %v365, %v407
        %v416 = vtanh.pop %v408
        %v417 = vtanh.pop %v409
        %v418 = vtanh.pop %v410
        %v419 = vtanh.pop %v411
        %v420 = vtanh.pop %v412
        %v421 = vtanh.pop %v413
        %v422 = vtanh.pop %v414
        %v423 = vtanh.pop %v415
        %v424 = vld [vmem:[%s3] sm:$0xff]
        %v425 = vld [vmem:[%s3 + $0x8] sm:$0xff]
        %v426 = vld [vmem:[%s3 + $0x10] sm:$0xff]
        %v427 = vld [vmem:[%s3 + $0x18] sm:$0xff]
        %v428 = vld [vmem:[%s4] sm:$0xff]
        %v429 = vld [vmem:[%s4 + $0x8] sm:$0xff]
        %v430 = vld [vmem:[%s4 + $0x10] sm:$0xff]
        %v431 = vld [vmem:[%s4 + $0x18] sm:$0xff]
        %433 = vset.pattern.permute.xlu0 0
        %434 = vperm.xlu0 %433, %v428
        %v435 = vpop.permute.xlu0 %434
        %438 = vset.pattern.permute.xlu0 0
        %439 = vperm.xlu0 %438, %v429
        %v440 = vpop.permute.xlu0 %439
        %443 = vset.pattern.permute.xlu0 0
        %444 = vperm.xlu0 %443, %v430
        %v445 = vpop.permute.xlu0 %444
        %448 = vset.pattern.permute.xlu0 0
        %449 = vperm.xlu0 %448, %v431
        %v450 = vpop.permute.xlu0 %449
        %vm452 = vcmask 261120
        %v454 = vsel %vm452, %v424, 0
        %v457 = vsel %vm452, %v425, 0
        %v460 = vsel %vm452, %v426, 0
        %v463 = vsel %vm452, %v427, 0
        %465 = vmatprep.subr.mxu0 0.0
        %466 = vmatpush1.msra.mxu0 0.0
        %467 = vmatprep.subr.mxu0 0.0
        %468 = vmatpush1.msra.mxu0 0.0
        %469 = vmatprep.subr.mxu0 0.0
        %470 = vmatpush1.msra.mxu0 0.0
        %471 = vmatprep.subr.mxu0 0.0
        %472 = vmatpush1.msra.mxu0 0.0
        %473 = vmatprep.subr.mxu0 0.0
        %474 = vmatpush1.msra.mxu0 0.0
        %475 = vmatprep.subr.mxu0 0.0
        %476 = vmatpush1.msra.mxu0 0.0
        %477 = vmatprep.subr.mxu0 0.0
        %478 = vmatpush1.msra.mxu0 0.0
        %479 = vmatprep.subr.mxu0 0.0
        %480 = vmatpush1.msra.mxu0 0.0
        %481 = vmatprep.subr.mxu0 0.0
        %482 = vmatpush1.msra.mxu0 0.0
        %483 = vmatprep.subr.mxu0 0.0
        %484 = vmatpush1.msra.mxu0 0.0
        %485 = vmatprep.subr.mxu0 0.0
        %486 = vmatpush1.msra.mxu0 0.0
        %487 = vmatprep.subr.mxu0 0.0
        %488 = vmatpush1.msra.mxu0 0.0
        %489 = vmatprep.subr.mxu0 %v423
        %490 = vmatpush1.msra.mxu0 %v422
        %491 = vmatprep.subr.mxu0 %v421
        %492 = vmatpush1.msra.mxu0 %v420
        %493 = vmatprep.subr.mxu0 %v419
        %494 = vmatpush1.msra.mxu0 %v418
        %495 = vmatprep.subr.mxu0 %v417
        %496 = vmatpush1.msra.mxu0 %v416
        %497 = vmatprep.subr.mxu0 0.0
        %498 = vmatpush2.msra.mxu0 0.0
        %499 = vmatprep.subr.mxu0 0.0
        %500 = vmatpush2.msra.mxu0 0.0
        %501 = vmatprep.subr.mxu0 0.0
        %502 = vmatpush2.msra.mxu0 0.0
        %503 = vmatprep.subr.mxu0 0.0
        %504 = vmatpush2.msra.mxu0 0.0
        %505 = vmatprep.subr.mxu0 0.0
        %506 = vmatpush2.msra.mxu0 0.0
        %507 = vmatprep.subr.mxu0 0.0
        %508 = vmatpush2.msra.mxu0 0.0
        %509 = vmatprep.subr.mxu0 0.0
        %510 = vmatpush2.msra.mxu0 0.0
        %511 = vmatprep.subr.mxu0 0.0
        %512 = vmatpush2.msra.mxu0 0.0
        %513 = vmatprep.subr.mxu0 0.0
        %514 = vmatpush2.msra.mxu0 0.0
        %515 = vmatprep.subr.mxu0 0.0
        %516 = vmatpush2.msra.mxu0 0.0
        %517 = vmatprep.subr.mxu0 0.0
        %518 = vmatpush2.msra.mxu0 0.0
        %519 = vmatprep.subr.mxu0 0.0
        %520 = vmatpush2.msra.mxu0 0.0
        %521 = vmatprep.subr.mxu0 0.0
        %522 = vmatpush2.msra.mxu0 0.0
        %523 = vmatprep.subr.mxu0 0.0
        %524 = vmatpush2.msra.mxu0 0.0
        %525 = vmatprep.subr.mxu0 0.0
        %526 = vmatpush2.msra.mxu0 0.0
        %527 = vmatprep.subr.mxu0 0.0
        %528 = vmatpush2.msra.mxu0 0.0
        %529 = vmatprep.mubr.f32.mxu0 0.0
        %530 = vmatmul.mubr.f32.gmra.mxu0 %v454
        %v531 = vpop.f32.mrf.mxu0
        %v532 = vadd.f32 %v435, %v531
        %v533 = vpop.f32.mrf.mxu0
        %v534 = vadd.f32 %v435, %v533
        %535 = vmatprep.mubr.f32.mxu0 0.0
        %536 = vmatmul.mubr.f32.gmra.mxu0 %v457
        %v537 = vpop.f32.mrf.mxu0
        %v538 = vadd.f32 %v440, %v537
        %v539 = vpop.f32.mrf.mxu0
        %v540 = vadd.f32 %v440, %v539
        %541 = vmatprep.mubr.f32.mxu0 0.0
        %542 = vmatmul.mubr.f32.gmra.mxu0 %v460
        %v543 = vpop.f32.mrf.mxu0
        %v544 = vadd.f32 %v445, %v543
        %v545 = vpop.f32.mrf.mxu0
        %v546 = vadd.f32 %v445, %v545
        %547 = vmatprep.mubr.f32.mxu0 0.0
        %548 = vmatmul.mubr.f32.gmra.mxu0 %v463
        %v549 = vpop.f32.mrf.mxu0
        %v550 = vadd.f32 %v450, %v549
        %v551 = vpop.f32.mrf.mxu0
        %v552 = vadd.f32 %v450, %v551
        %553 = vdwg.mxu0
        %v554 = vtanh.pop %v532
        %v555 = vtanh.pop %v534
        %v556 = vtanh.pop %v538
        %v557 = vtanh.pop %v540
        %v558 = vtanh.pop %v544
        %v559 = vtanh.pop %v546
        %v560 = vtanh.pop %v550
        %v561 = vtanh.pop %v552
        %v562 = vld [vmem:[%s5] sm:$0x1]
        %v563 = vld [vmem:[#allocation2] sm:$0x1]
        %565 = vset.pattern.permute.xlu0 0
        %566 = vperm.xlu0 %565, %v563
        %v567 = vpop.permute.xlu0 %566
        %v569 = vlaneseq
        %v570 = vshrl.u32 %v569, 7
        %v571 = vsub.s32 0, %v570
        %v572 = vrot.slane %v567, %v571
        %v574 = vsel %vm452, %v562, 0
        %576 = vmatprep.subr.mxu0 0.0
        %577 = vmatpush1.msra.mxu0 0.0
        %578 = vmatprep.subr.mxu0 0.0
        %579 = vmatpush1.msra.mxu0 0.0
        %580 = vmatprep.subr.mxu0 0.0
        %581 = vmatpush1.msra.mxu0 0.0
        %582 = vmatprep.subr.mxu0 0.0
        %583 = vmatpush1.msra.mxu0 0.0
        %584 = vmatprep.subr.mxu0 0.0
        %585 = vmatpush1.msra.mxu0 0.0
        %586 = vmatprep.subr.mxu0 0.0
        %587 = vmatpush1.msra.mxu0 0.0
        %588 = vmatprep.subr.mxu0 0.0
        %589 = vmatpush1.msra.mxu0 0.0
        %590 = vmatprep.subr.mxu0 0.0
        %591 = vmatpush1.msra.mxu0 0.0
        %592 = vmatprep.subr.mxu0 0.0
        %593 = vmatpush1.msra.mxu0 0.0
        %594 = vmatprep.subr.mxu0 0.0
        %595 = vmatpush1.msra.mxu0 0.0
        %596 = vmatprep.subr.mxu0 0.0
        %597 = vmatpush1.msra.mxu0 0.0
        %598 = vmatprep.subr.mxu0 0.0
        %599 = vmatpush1.msra.mxu0 0.0
        %600 = vmatprep.subr.mxu0 %v561
        %601 = vmatpush1.msra.mxu0 %v560
        %602 = vmatprep.subr.mxu0 %v559
        %603 = vmatpush1.msra.mxu0 %v558
        %604 = vmatprep.subr.mxu0 %v557
        %605 = vmatpush1.msra.mxu0 %v556
        %606 = vmatprep.subr.mxu0 %v555
        %607 = vmatpush1.msra.mxu0 %v554
        %608 = vmatprep.subr.mxu0 0.0
        %609 = vmatpush2.msra.mxu0 0.0
        %610 = vmatprep.subr.mxu0 0.0
        %611 = vmatpush2.msra.mxu0 0.0
        %612 = vmatprep.subr.mxu0 0.0
        %613 = vmatpush2.msra.mxu0 0.0
        %614 = vmatprep.subr.mxu0 0.0
        %615 = vmatpush2.msra.mxu0 0.0
        %616 = vmatprep.subr.mxu0 0.0
        %617 = vmatpush2.msra.mxu0 0.0
        %618 = vmatprep.subr.mxu0 0.0
        %619 = vmatpush2.msra.mxu0 0.0
        %620 = vmatprep.subr.mxu0 0.0
        %621 = vmatpush2.msra.mxu0 0.0
        %622 = vmatprep.subr.mxu0 0.0
        %623 = vmatpush2.msra.mxu0 0.0
        %624 = vmatprep.subr.mxu0 0.0
        %625 = vmatpush2.msra.mxu0 0.0
        %626 = vmatprep.subr.mxu0 0.0
        %627 = vmatpush2.msra.mxu0 0.0
        %628 = vmatprep.subr.mxu0 0.0
        %629 = vmatpush2.msra.mxu0 0.0
        %630 = vmatprep.subr.mxu0 0.0
        %631 = vmatpush2.msra.mxu0 0.0
        %632 = vmatprep.subr.mxu0 0.0
        %633 = vmatpush2.msra.mxu0 0.0
        %634 = vmatprep.subr.mxu0 0.0
        %635 = vmatpush2.msra.mxu0 0.0
        %636 = vmatprep.subr.mxu0 0.0
        %637 = vmatpush2.msra.mxu0 0.0
        %638 = vmatprep.subr.mxu0 0.0
        %639 = vmatpush2.msra.mxu0 0.0
        %640 = vmatprep.mubr.f32.mxu0 0.0
        %641 = vmatmul.mubr.f32.gmra.mxu0 %v574
        %v642 = vpop.f32.mrf.mxu0
        %v643 = vadd.f32 %v572, %v642
        %v644 = vpop.f32.mrf.mxu0
        %v645 = vadd.f32 %v572, %v644
        %646 = vdwg.mxu0
        %v649 = vcombine.low %v643, %v645
        %v651 = vunpack.c.l.s4 1966171168
        %v652 = vunpack.c.0.s8 %v651
        %v653 = vlaneseq
        %v654 = vshrl.u32 %v653, 7
        %v655 = vsub.s32 %v652, %v654
        %v656 = vrot.slane %v649, %v655
        %v658 = vunpack.c.l.s4 1966171168
        %v659 = vunpack.c.0.s8 %v658
        %v660 = vlaneseq
        %v661 = vshrl.u32 %v660, 7
        %v662 = vsub.s32 %v659, %v661
        %v663 = vrot.slane %v656, %v662
        %v665 = vlaneseq
        %vm666 = vcmp.ge.s32.totalorder %v665, 0
        %vm667 = vcmp.lt.s32.totalorder %v665, 256
        %vm668 = vmand %vm666, %vm667
        %669 = vst.msk [vmem:[%s274] sm:$0x3] %vm668, %v663
        %s670 = sand.u32 %s183, 1
        %s671 = scalar_lea.sflag [#allocation4], %s670
        %s672 = sand.u32 %s183, 1
        %s673 = smul.addr %s672, 2
        %s674 = scalar_lea.vmem [#allocation3], %s673
        // Predicated region
        $region49: #{tpu_custom_call.1} parent=47 // pred_check
          %p675 = pneg %p193
        $region50: #{tpu_custom_call.1} parent=47 // pred_check_branch
          %677 = sbr.rel (%p675) target = $region52
        $region51: #{tpu_custom_call.1} parent=47 // pred_region
          %s678 = smul.u32 2, %s23
          %s680 = ssub.s32 32, 32
          %681 = vsyncadd %s671, %s680
          %s682 = smul.addr %s678, 16
          %s683 = scalar_lea.hbm %s7, %s682
          %s685 = sshll.u32 %s674, 4
          %s686 = int_to_ptr.vmem [resolvable:$true] %s685
          %688 = dma.vmem_to_hbm [thread:$0]  %s686, 32, %s683, %s671
        $region52: #{tpu_custom_call.1} parent=47 // pred_fallthru
          _
      $region48: #{tpu_custom_call.1} parent=5 // pred_fallthru
        _
      %p689 = scmp.le.s32.totalorder 2, %s18
      // Predicated region
      $region53: #{tpu_custom_call.1} parent=5 // pred_check
        %p690 = pneg %p689
      $region54: #{tpu_custom_call.1} parent=5 // pred_check_branch
        %692 = sbr.rel (%p690) target = $region56
      $region55: #{tpu_custom_call.1} parent=5 // pred_region
        %s693 = ssub.s32 %s18, 2
        // Predicated region
        $region57: #{tpu_custom_call.1} parent=55 // pred_check
          %p694 = pneg %p199
        $region58: #{tpu_custom_call.1} parent=55 // pred_check_branch
          %696 = sbr.rel (%p694) target = $region60
        $region59: #{tpu_custom_call.1} parent=55 // pred_region
          %s697 = sand.u32 %s184, 1
          %s698 = scalar_lea.sflag [#allocation4], %s697
          %s699 = sand.u32 %s184, 1
          %s700 = smul.addr %s699, 2
          %s701 = scalar_lea.vmem [#allocation3], %s700
          %702 = dma.done %s698, 32
        $region60: #{tpu_custom_call.1} parent=55 // pred_fallthru
          _
      $region56: #{tpu_custom_call.1} parent=5 // pred_fallthru
        _
    $region6: #{tpu_custom_call.1} parent=1 // loop_footer
      %s22 = sadd.s32 1, %s18
    $region7: #{tpu_custom_call.1} parent=1 // loop_footer_branch
      %17 = sbr.rel target = $region3
    $region8: #{tpu_custom_call.1} parent=1 // loop_exit
      _
    %703 = vsyncpa [#allocation4], 1
    %s704 = scalar_lea.sflag [#allocation4], 1
    %705 = vsyncpa %s704, 1

</llo_original>
